<compile_context>
chip_gen: v6e
topology: v6e:2x2x1
jax: 0.10.0
libtpu: 0.0.40
codegen_flags: <defaults>
</compile_context>

<pallas_src>
import functools

import jax
import jax.numpy as jnp
from jax.experimental import pallas as pl
from jax.experimental.pallas import tpu as pltpu

LANE = 128


def _round_up(n, m):
    return ((n + m - 1) // m) * m


def _mlp_kernel(x_ref,
                w1_ref, w2_ref, w3_ref, w4_ref, w5_ref, w6_ref,
                b_ref, o_ref, *, widths):
    """Fused 6-layer MLP on one batch tile.

    bf16 matmuls on the MXU with f32 accumulation; bias add + ReLU in f32.
    `widths` are the static, lane-padded output widths of each layer, used to
    slice the concatenated bias slab.
    """
    w_refs = (w1_ref, w2_ref, w3_ref, w4_ref, w5_ref, w6_ref)
    h = x_ref[...].astype(jnp.bfloat16)                 # cast on-chip; x is read from HBM once
    off = 0
    for li, (w_ref, width) in enumerate(zip(w_refs, widths)):
        acc = jnp.dot(h, w_ref[...], preferred_element_type=jnp.float32)
        acc = acc + b_ref[:, off:off + width]           # f32 bias row, broadcast over batch rows
        off += width
        if li < len(w_refs) - 1:
            h = jnp.maximum(acc, 0.0).astype(jnp.bfloat16)   # ReLU, back to bf16 for next MXU pass
        else:
            o_ref[...] = acc.astype(o_ref.dtype)        # final layer: bf16 store (halved writeback)


def pack_params(params, input_size, output_size):
    """Pad/cast params for the kernel.

    params = [(w, b), ...] with w: [in, out] (transposed vs PyTorch), b: [out].
    Returns (bf16 weights with lane-padded (128-mult) output widths, one f32
    lane-dense bias slab, per-layer padded widths, true output size).
    Layer 1 keeps its true fan_in so x can be read unpadded.  Zero padding is
    semantics-preserving: ReLU(0)=0 and padded bias entries are 0.
    """
    w_list, widths, bias_chunks = [], [], []
    prev_dim = input_size                       # true fan_in for layer 1 (x is not padded)
    for (w, b) in params:
        fan_in, fan_out = w.shape
        out_pad = _round_up(fan_out, LANE)
        wp = jnp.zeros((prev_dim, out_pad), jnp.bfloat16)
        wp = wp.at[:fan_in, :fan_out].set(w.astype(jnp.bfloat16))
        bp = jnp.zeros((out_pad,), jnp.float32).at[:fan_out].set(
            b.reshape(-1).astype(jnp.float32))
        w_list.append(wp)
        bias_chunks.append(bp)
        widths.append(out_pad)
        prev_dim = out_pad
    bias_cat = jnp.concatenate(bias_chunks).reshape(1, -1)
    return w_list, bias_cat, tuple(widths), output_size


def _batch_tiling(B, block_b):
    """Pick (batch tile rows, grid steps).

    * B < 256: one tile covering the whole batch (block dim == array dim, always legal).
    * B >= 256: at least 2 steps (v7x megacore sharding of the 'parallel' axis), tiles of at
      most block_b rows, sized ceil(B/n) rounded to 16 so tail waste is < 16 rows per tile.
    """
    if B < 256:
        return B, 1
    n = max(2, -(-B // block_b))
    tb = _round_up(-(-B // n), 16)
    return tb, n


def malware_detection_forward(x, packed, *, block_b=512):
    """Forward pass. packed = output of pack_params. Returns f32 [B, output_size]."""
    w_list, bias_cat, widths, out_size = packed
    B, in_features = x.shape
    assert in_features == w_list[0].shape[0]
    out_pad = widths[-1]

    x = x.astype(jnp.float32)                   # matches the module's x.float()
    tb, n_steps = _batch_tiling(B, block_b)

    kernel = functools.partial(_mlp_kernel, widths=widths)

    # x: batch-tiled, read straight from HBM; last block dim equals the full array dim so no
    # host-side lane padding is needed (cast to bf16 happens inside the kernel).
    in_specs = [pl.BlockSpec((tb, in_features), lambda i: (i, 0))]
    # Weights / bias slab: constant index_map -> VMEM-resident; single-buffered so the pipeline
    # doesn't double their VMEM footprint as hidden_size scales.
    for w in w_list:
        in_specs.append(pl.BlockSpec(w.shape, lambda i: (0, 0),
                                     pipeline_mode=pl.Buffered(1)))
    in_specs.append(pl.BlockSpec(bias_cat.shape, lambda i: (0, 0),
                                 pipeline_mode=pl.Buffered(1)))

    # Explicit VMEM budget: single-buffered weights/bias + double-buffered x/out tiles
    # + headroom for live per-layer activations; clamped to v7x's 64 MiB physical VMEM.
    weight_bytes = sum(wi.shape[0] * wi.shape[1] * 2 for wi in w_list) + int(bias_cat.size) * 4
    tile_bytes = 2 * tb * in_features * 4 + 2 * tb * out_pad * 2
    act_bytes = 6 * tb * max(widths) * 4
    vmem_limit = int(1.25 * (weight_bytes + tile_bytes + act_bytes)) + (4 << 20)
    vmem_limit = max(8 << 20, min(vmem_limit, 64 << 20))

    out = pl.pallas_call(
        kernel,
        out_shape=jax.ShapeDtypeStruct((B, out_pad), jnp.bfloat16),
        grid=(n_steps,),
        in_specs=in_specs,
        out_specs=pl.BlockSpec((tb, out_pad), lambda i: (i, 0)),
        compiler_params=pltpu.CompilerParams(
            dimension_semantics=("parallel",),   # shard batch tiles across v7x's 2 TensorCores
            vmem_limit_bytes=vmem_limit,
        ),
    )(x, *w_list, bias_cat)

    # TODO(synk): the module defines nn.Softmax but never applies it in forward(); intentionally
    # not applied here to keep forward-pass semantics identical.
    return out[:, :out_size].astype(jnp.float32)


def init_params(key, input_size, hidden_size, output_size):
    """Deterministic init matching the module's layer shapes (Kaiming-uniform-ish)."""
    dims = [
        (input_size, hidden_size),           # fc1
        (hidden_size, hidden_size * 2),      # fc2
        (hidden_size * 2, hidden_size * 4),  # fc3
        (hidden_size * 4, hidden_size * 2),  # fc4
        (hidden_size * 2, hidden_size),      # fc5
        (hidden_size, output_size),          # fc6
    ]
    params = []
    for i, (fan_in, fan_out) in enumerate(dims):
        kw, kb = jax.random.split(jax.random.fold_in(key, i))
        bound = 1.0 / jnp.sqrt(jnp.float32(fan_in))
        w = jax.random.uniform(kw, (fan_in, fan_out), jnp.float32, -bound, bound)
        b = jax.random.uniform(kb, (fan_out,), jnp.float32, -bound, bound)
        params.append((w, b))
    return params


def reference_forward(x, params):
    """Pure-JAX reference mimicking the kernel numerics (bf16 matmuls, f32 acc, bf16 output)."""
    h = x.astype(jnp.bfloat16)
    for i, (w, b) in enumerate(params):
        h = jnp.dot(h, w.astype(jnp.bfloat16), preferred_element_type=jnp.float32) + b
        if i < len(params) - 1:
            h = jnp.maximum(h, 0.0).astype(jnp.bfloat16)
    return h.astype(jnp.bfloat16).astype(jnp.float32)


if __name__ == "__main__":
    key = jax.random.PRNGKey(0)
    k_x, k_p = jax.random.split(key)

    batch = 8
    input_size = 64
    hidden_size = 32
    output_size = 8

    x = jax.random.normal(k_x, (batch, input_size), jnp.float32)
    params = init_params(k_p, input_size, hidden_size, output_size)
    packed = pack_params(params, input_size, output_size)

    out = malware_detection_forward(x, packed)
    out = jax.block_until_ready(out)

    ref = reference_forward(x, params)
    assert out.shape == (batch, output_size)
    assert jnp.allclose(out, ref, atol=2e-2, rtol=2e-2), "mismatch vs reference"

    print("KERNEL_OK")
</pallas_src>

<mosaic_0001>
module attributes {stable_mosaic.version = 11 : i64} {
  func.func @_mlp_kernel(%arg0: i32, %arg1: memref<8x64xf32, #tpu.memory_space<vmem>>, %arg2: memref<64x128xbf16, #tpu.memory_space<vmem>>, %arg3: memref<128x128xbf16, #tpu.memory_space<vmem>>, %arg4: memref<128x128xbf16, #tpu.memory_space<vmem>>, %arg5: memref<128x128xbf16, #tpu.memory_space<vmem>>, %arg6: memref<128x128xbf16, #tpu.memory_space<vmem>>, %arg7: memref<128x128xbf16, #tpu.memory_space<vmem>>, %arg8: memref<1x768xf32, #tpu.memory_space<vmem>>, %arg9: memref<8x128xbf16, #tpu.memory_space<vmem>>) attributes {dimension_semantics = [#tpu.dimension_semantics<parallel>], iteration_bounds = array<i64: 1>, scalar_prefetch = 0 : i64, scratch_operands = 0 : i64, tpu.core_type = #tpu.core_type<tc>, window_params = [{transform_indices = @transform_0, window_bounds = array<i64: 8, 64>}, {pipeline_mode = #tpu.pipeline_mode<synchronous>, transform_indices = @transform_1, window_bounds = array<i64: 64, 128>}, {pipeline_mode = #tpu.pipeline_mode<synchronous>, transform_indices = @transform_2, window_bounds = array<i64: 128, 128>}, {pipeline_mode = #tpu.pipeline_mode<synchronous>, transform_indices = @transform_3, window_bounds = array<i64: 128, 128>}, {pipeline_mode = #tpu.pipeline_mode<synchronous>, transform_indices = @transform_4, window_bounds = array<i64: 128, 128>}, {pipeline_mode = #tpu.pipeline_mode<synchronous>, transform_indices = @transform_5, window_bounds = array<i64: 128, 128>}, {pipeline_mode = #tpu.pipeline_mode<synchronous>, transform_indices = @transform_6, window_bounds = array<i64: 128, 128>}, {pipeline_mode = #tpu.pipeline_mode<synchronous>, transform_indices = @transform_7, window_bounds = array<i64: 1, 768>}, {transform_indices = @transform_8, window_bounds = array<i64: 8, 128>}]} {
    %c0 = arith.constant 0 : index
    %c0_0 = arith.constant 0 : index
    %0 = vector.load %arg1[%c0, %c0_0] : memref<8x64xf32, #tpu.memory_space<vmem>>, vector<8x64xf32>
    %1 = arith.truncf %0 : vector<8x64xf32> to vector<8x64xbf16>
    %c0_1 = arith.constant 0 : index
    %c0_2 = arith.constant 0 : index
    %2 = vector.load %arg2[%c0_1, %c0_2] : memref<64x128xbf16, #tpu.memory_space<vmem>>, vector<64x128xbf16>
    %cst = arith.constant dense<0.000000e+00> : vector<8x128xf32>
    %3 = tpu.matmul %1, %2, %cst {dimension_numbers = #tpu.dot_dimension_numbers<[1], [0], [0], [1], [0, 0, 1, 1], [], []>} : vector<8x64xbf16>, vector<64x128xbf16>, vector<8x128xf32> -> vector<8x128xf32>
    %c0_3 = arith.constant 0 : index
    %c0_4 = arith.constant 0 : index
    %4 = vector.load %arg8[%c0_3, %c0_4] : memref<1x768xf32, #tpu.memory_space<vmem>>, vector<1x128xf32>
    %5 = vector.broadcast %4 : vector<1x128xf32> to vector<8x128xf32>
    %6 = arith.addf %3, %5 : vector<8x128xf32>
    %cst_5 = arith.constant 0.000000e+00 : f32
    %7 = vector.broadcast %cst_5 : f32 to vector<8x128xf32>
    %8 = arith.maximumf %6, %7 : vector<8x128xf32>
    %9 = arith.truncf %8 : vector<8x128xf32> to vector<8x128xbf16>
    %c0_6 = arith.constant 0 : index
    %c0_7 = arith.constant 0 : index
    %10 = vector.load %arg3[%c0_6, %c0_7] : memref<128x128xbf16, #tpu.memory_space<vmem>>, vector<128x128xbf16>
    %cst_8 = arith.constant dense<0.000000e+00> : vector<8x128xf32>
    %11 = tpu.matmul %9, %10, %cst_8 {dimension_numbers = #tpu.dot_dimension_numbers<[1], [0], [0], [1], [0, 0, 1, 1], [], []>} : vector<8x128xbf16>, vector<128x128xbf16>, vector<8x128xf32> -> vector<8x128xf32>
    %c0_9 = arith.constant 0 : index
    %c128 = arith.constant 128 : index
    %12 = vector.load %arg8[%c0_9, %c128] : memref<1x768xf32, #tpu.memory_space<vmem>>, vector<1x128xf32>
    %13 = vector.broadcast %12 : vector<1x128xf32> to vector<8x128xf32>
    %14 = arith.addf %11, %13 : vector<8x128xf32>
    %cst_10 = arith.constant 0.000000e+00 : f32
    %15 = vector.broadcast %cst_10 : f32 to vector<8x128xf32>
    %16 = arith.maximumf %14, %15 : vector<8x128xf32>
    %17 = arith.truncf %16 : vector<8x128xf32> to vector<8x128xbf16>
    %c0_11 = arith.constant 0 : index
    %c0_12 = arith.constant 0 : index
    %18 = vector.load %arg4[%c0_11, %c0_12] : memref<128x128xbf16, #tpu.memory_space<vmem>>, vector<128x128xbf16>
    %cst_13 = arith.constant dense<0.000000e+00> : vector<8x128xf32>
    %19 = tpu.matmul %17, %18, %cst_13 {dimension_numbers = #tpu.dot_dimension_numbers<[1], [0], [0], [1], [0, 0, 1, 1], [], []>} : vector<8x128xbf16>, vector<128x128xbf16>, vector<8x128xf32> -> vector<8x128xf32>
    %c0_14 = arith.constant 0 : index
    %c256 = arith.constant 256 : index
    %20 = vector.load %arg8[%c0_14, %c256] : memref<1x768xf32, #tpu.memory_space<vmem>>, vector<1x128xf32>
    %21 = vector.broadcast %20 : vector<1x128xf32> to vector<8x128xf32>
    %22 = arith.addf %19, %21 : vector<8x128xf32>
    %cst_15 = arith.constant 0.000000e+00 : f32
    %23 = vector.broadcast %cst_15 : f32 to vector<8x128xf32>
    %24 = arith.maximumf %22, %23 : vector<8x128xf32>
    %25 = arith.truncf %24 : vector<8x128xf32> to vector<8x128xbf16>
    %c0_16 = arith.constant 0 : index
    %c0_17 = arith.constant 0 : index
    %26 = vector.load %arg5[%c0_16, %c0_17] : memref<128x128xbf16, #tpu.memory_space<vmem>>, vector<128x128xbf16>
    %cst_18 = arith.constant dense<0.000000e+00> : vector<8x128xf32>
    %27 = tpu.matmul %25, %26, %cst_18 {dimension_numbers = #tpu.dot_dimension_numbers<[1], [0], [0], [1], [0, 0, 1, 1], [], []>} : vector<8x128xbf16>, vector<128x128xbf16>, vector<8x128xf32> -> vector<8x128xf32>
    %c0_19 = arith.constant 0 : index
    %c384 = arith.constant 384 : index
    %28 = vector.load %arg8[%c0_19, %c384] : memref<1x768xf32, #tpu.memory_space<vmem>>, vector<1x128xf32>
    %29 = vector.broadcast %28 : vector<1x128xf32> to vector<8x128xf32>
    %30 = arith.addf %27, %29 : vector<8x128xf32>
    %cst_20 = arith.constant 0.000000e+00 : f32
    %31 = vector.broadcast %cst_20 : f32 to vector<8x128xf32>
    %32 = arith.maximumf %30, %31 : vector<8x128xf32>
    %33 = arith.truncf %32 : vector<8x128xf32> to vector<8x128xbf16>
    %c0_21 = arith.constant 0 : index
    %c0_22 = arith.constant 0 : index
    %34 = vector.load %arg6[%c0_21, %c0_22] : memref<128x128xbf16, #tpu.memory_space<vmem>>, vector<128x128xbf16>
    %cst_23 = arith.constant dense<0.000000e+00> : vector<8x128xf32>
    %35 = tpu.matmul %33, %34, %cst_23 {dimension_numbers = #tpu.dot_dimension_numbers<[1], [0], [0], [1], [0, 0, 1, 1], [], []>} : vector<8x128xbf16>, vector<128x128xbf16>, vector<8x128xf32> -> vector<8x128xf32>
    %c0_24 = arith.constant 0 : index
    %c512 = arith.constant 512 : index
    %36 = vector.load %arg8[%c0_24, %c512] : memref<1x768xf32, #tpu.memory_space<vmem>>, vector<1x128xf32>
    %37 = vector.broadcast %36 : vector<1x128xf32> to vector<8x128xf32>
    %38 = arith.addf %35, %37 : vector<8x128xf32>
    %cst_25 = arith.constant 0.000000e+00 : f32
    %39 = vector.broadcast %cst_25 : f32 to vector<8x128xf32>
    %40 = arith.maximumf %38, %39 : vector<8x128xf32>
    %41 = arith.truncf %40 : vector<8x128xf32> to vector<8x128xbf16>
    %c0_26 = arith.constant 0 : index
    %c0_27 = arith.constant 0 : index
    %42 = vector.load %arg7[%c0_26, %c0_27] : memref<128x128xbf16, #tpu.memory_space<vmem>>, vector<128x128xbf16>
    %cst_28 = arith.constant dense<0.000000e+00> : vector<8x128xf32>
    %43 = tpu.matmul %41, %42, %cst_28 {dimension_numbers = #tpu.dot_dimension_numbers<[1], [0], [0], [1], [0, 0, 1, 1], [], []>} : vector<8x128xbf16>, vector<128x128xbf16>, vector<8x128xf32> -> vector<8x128xf32>
    %c0_29 = arith.constant 0 : index
    %c640 = arith.constant 640 : index
    %44 = vector.load %arg8[%c0_29, %c640] : memref<1x768xf32, #tpu.memory_space<vmem>>, vector<1x128xf32>
    %45 = vector.broadcast %44 : vector<1x128xf32> to vector<8x128xf32>
    %46 = arith.addf %43, %45 : vector<8x128xf32>
    %47 = arith.truncf %46 : vector<8x128xf32> to vector<8x128xbf16>
    %c0_30 = arith.constant 0 : index
    %c0_31 = arith.constant 0 : index
    %48 = vector.load %arg9[%c0_30, %c0_31] : memref<8x128xbf16, #tpu.memory_space<vmem>>, vector<8x128xbf16>
    tpu.vector_store %arg9[%c0_30, %c0_31], %47 {strides = array<i32>} : memref<8x128xbf16, #tpu.memory_space<vmem>>, vector<8x128xbf16>,
    return
  }
  func.func @transform_0(%arg0: i32) -> (i32, i32) {
    %c0_i32 = arith.constant 0 : i32
    %c0_i32_0 = arith.constant 0 : i32
    return %arg0, %c0_i32 : i32, i32
  }
  func.func @transform_1(%arg0: i32) -> (i32, i32) {
    %c0_i32 = arith.constant 0 : i32
    %c0_i32_0 = arith.constant 0 : i32
    %c0_i32_1 = arith.constant 0 : i32
    return %c0_i32, %c0_i32_0 : i32, i32
  }
  func.func @transform_2(%arg0: i32) -> (i32, i32) {
    %c0_i32 = arith.constant 0 : i32
    %c0_i32_0 = arith.constant 0 : i32
    %c0_i32_1 = arith.constant 0 : i32
    return %c0_i32, %c0_i32_0 : i32, i32
  }
  func.func @transform_3(%arg0: i32) -> (i32, i32) {
    %c0_i32 = arith.constant 0 : i32
    %c0_i32_0 = arith.constant 0 : i32
    %c0_i32_1 = arith.constant 0 : i32
    return %c0_i32, %c0_i32_0 : i32, i32
  }
  func.func @transform_4(%arg0: i32) -> (i32, i32) {
    %c0_i32 = arith.constant 0 : i32
    %c0_i32_0 = arith.constant 0 : i32
    %c0_i32_1 = arith.constant 0 : i32
    return %c0_i32, %c0_i32_0 : i32, i32
  }
  func.func @transform_5(%arg0: i32) -> (i32, i32) {
    %c0_i32 = arith.constant 0 : i32
    %c0_i32_0 = arith.constant 0 : i32
    %c0_i32_1 = arith.constant 0 : i32
    return %c0_i32, %c0_i32_0 : i32, i32
  }
  func.func @transform_6(%arg0: i32) -> (i32, i32) {
    %c0_i32 = arith.constant 0 : i32
    %c0_i32_0 = arith.constant 0 : i32
    %c0_i32_1 = arith.constant 0 : i32
    return %c0_i32, %c0_i32_0 : i32, i32
  }
  func.func @transform_7(%arg0: i32) -> (i32, i32) {
    %c0_i32 = arith.constant 0 : i32
    %c0_i32_0 = arith.constant 0 : i32
    %c0_i32_1 = arith.constant 0 : i32
    return %c0_i32, %c0_i32_0 : i32, i32
  }
  func.func @transform_8(%arg0: i32) -> (i32, i32) {
    %c0_i32 = arith.constant 0 : i32
    %c0_i32_0 = arith.constant 0 : i32
    return %arg0, %c0_i32 : i32, i32
  }
}

</mosaic_0001>

<llo_original>
// kernel: tpu_custom_call.1
$region0: #{tpu_custom_call.1}
  #allocation0 [shape = 'u32[]', space=smem, size = 0x4, offset = 0x4, fixed_abs, tag = 'smem constant byte address 0x4 - core index']
  #allocation1 [shape = 'u32[144,128]{1,0:T(1,128)}', space=vmem, size = 0x12000, scoped, tag = 'internal scratch']
  %s0 = inlined_call_operand.hbm [shape: f32[8,64], index: 0, kind: input, shape index: {}]
  %s1 = inlined_call_operand.hbm [shape: bf16[64,128], index: 1, kind: input, shape index: {}]
  %s2 = inlined_call_operand.hbm [shape: bf16[128,128], index: 2, kind: input, shape index: {}]
  %s3 = inlined_call_operand.hbm [shape: bf16[128,128], index: 3, kind: input, shape index: {}]
  %s4 = inlined_call_operand.hbm [shape: bf16[128,128], index: 4, kind: input, shape index: {}]
  %s5 = inlined_call_operand.hbm [shape: bf16[128,128], index: 5, kind: input, shape index: {}]
  %s6 = inlined_call_operand.hbm [shape: bf16[128,128], index: 6, kind: input, shape index: {}]
  %s7 = inlined_call_operand.vmem [shape: f32[1,768], index: 7, kind: input, shape index: {}]
  %s8 = inlined_call_operand.hbm [shape: bf16[8,128], index: 8, kind: output, shape index: {}]
  %s9 = sld [smem:[#allocation0]]
  $region70: #{tpu_custom_call.1} parent=0
    _
  %s11 = ssub.s32 1, %s9
  %s12 = scalar_select 0, %s11, %s9
  $region1: #{tpu_custom_call.1} parent=0
    #allocation2 [shape = 'u8[4096]{0}', space=vmem, size = 0x1000, scoped, tag = 'input window, operand 0, single buffered']
    #allocation3 [shape = 's32[1]{0}', space=sflag, size = 0x4, scoped, tag = 'scoped memory for tpu_custom_call.1']
    #allocation4 [shape = 's32[1]{0}', space=sflag, size = 0x4, scoped, tag = 'scoped memory for tpu_custom_call.1']
    #allocation5 [shape = 'u8[16384]{0}', space=vmem, size = 0x4000, scoped, tag = 'input window, operand 1, single buffered']
    #allocation6 [shape = 's32[1]{0}', space=sflag, size = 0x4, scoped, tag = 'scoped memory for tpu_custom_call.1']
    #allocation7 [shape = 'u8[32768]{0}', space=vmem, size = 0x8000, scoped, tag = 'input window, operand 2, single buffered']
    #allocation8 [shape = 'u8[32768]{0}', space=vmem, size = 0x8000, scoped, tag = 'input window, operand 3, single buffered']
    #allocation9 [shape = 's32[1]{0}', space=sflag, size = 0x4, scoped, tag = 'scoped memory for tpu_custom_call.1']
    #allocation10 [shape = 'u8[32768]{0}', space=vmem, size = 0x8000, scoped, tag = 'input window, operand 4, single buffered']
    #allocation11 [shape = 'u8[32768]{0}', space=vmem, size = 0x8000, scoped, tag = 'input window, operand 5, single buffered']
    #allocation12 [shape = 's32[1]{0}', space=sflag, size = 0x4, scoped, tag = 'scoped memory for tpu_custom_call.1']
    #allocation13 [shape = 'u8[32768]{0}', space=vmem, size = 0x8000, scoped, tag = 'input window, operand 6, single buffered']
    #allocation14 [shape = 'u8[2048]{0}', space=vmem, size = 0x800, scoped, tag = 'output window, operand 0, single buffered']
    %13 = vsyncpa [#allocation3], 0
    %14 = vsyncpa [#allocation6], 0
    %15 = vsyncpa [#allocation9], 0
    %16 = vsyncpa [#allocation12], 0
    %17 = vsyncpa [#allocation4], 0
    // Predicated region
    $region2: #{tpu_custom_call.1} parent=1 // pred_check
      _
    $region3: #{tpu_custom_call.1} parent=1 // pred_check_branch
      %19 = sbr.rel (0) target = $region5
    $region4: #{tpu_custom_call.1} parent=1 // pred_region
      %s21 = ssub.s32 128, 128
      %22 = vsyncadd [#allocation3], %s21
      %s24 = sshll.u32 [#allocation2], 4
      %s25 = int_to_ptr.vmem [resolvable:$true] %s24
      %27 = dma.hbm_to_vmem [thread:$0]  %s0, 128, %s25, [#allocation3]
    $region5: #{tpu_custom_call.1} parent=1 // pred_fallthru
      _
    // Predicated region
    $region6: #{tpu_custom_call.1} parent=1 // pred_check
      _
    $region7: #{tpu_custom_call.1} parent=1 // pred_check_branch
      %29 = sbr.rel (0) target = $region9
    $region8: #{tpu_custom_call.1} parent=1 // pred_region
      %s31 = ssub.s32 512, 512
      %32 = vsyncadd [#allocation6], %s31
      %s33 = sshll.u32 [#allocation5], 4
      %s34 = int_to_ptr.vmem [resolvable:$true] %s33
      %39 = dma.hbm_to_vmem [thread:$0]  %s1, 512, %s34, [#allocation6], 64, 64, 4
    $region9: #{tpu_custom_call.1} parent=1 // pred_fallthru
      _
    // Predicated region
    $region10: #{tpu_custom_call.1} parent=1 // pred_check
      _
    $region11: #{tpu_custom_call.1} parent=1 // pred_check_branch
      %41 = sbr.rel (0) target = $region13
    $region12: #{tpu_custom_call.1} parent=1 // pred_region
      %s43 = ssub.s32 1024, 1024
      %44 = vsyncadd [#allocation6], %s43
      %s45 = sshll.u32 [#allocation7], 4
      %s46 = int_to_ptr.vmem [resolvable:$true] %s45
      %51 = dma.hbm_to_vmem [thread:$0]  %s2, 1024, %s46, [#allocation6], 64, 64, 4
    $region13: #{tpu_custom_call.1} parent=1 // pred_fallthru
      _
    // Predicated region
    $region14: #{tpu_custom_call.1} parent=1 // pred_check
      _
    $region15: #{tpu_custom_call.1} parent=1 // pred_check_branch
      %53 = sbr.rel (0) target = $region17
    $region16: #{tpu_custom_call.1} parent=1 // pred_region
      %s55 = ssub.s32 1024, 1024
      %56 = vsyncadd [#allocation9], %s55
      %s57 = sshll.u32 [#allocation8], 4
      %s58 = int_to_ptr.vmem [resolvable:$true] %s57
      %63 = dma.hbm_to_vmem [thread:$0]  %s3, 1024, %s58, [#allocation9], 64, 64, 4
    $region17: #{tpu_custom_call.1} parent=1 // pred_fallthru
      _
    // Predicated region
    $region18: #{tpu_custom_call.1} parent=1 // pred_check
      _
    $region19: #{tpu_custom_call.1} parent=1 // pred_check_branch
      %65 = sbr.rel (0) target = $region21
    $region20: #{tpu_custom_call.1} parent=1 // pred_region
      %s67 = ssub.s32 1024, 1024
      %68 = vsyncadd [#allocation9], %s67
      %s69 = sshll.u32 [#allocation10], 4
      %s70 = int_to_ptr.vmem [resolvable:$true] %s69
      %75 = dma.hbm_to_vmem [thread:$0]  %s4, 1024, %s70, [#allocation9], 64, 64, 4
    $region21: #{tpu_custom_call.1} parent=1 // pred_fallthru
      _
    // Predicated region
    $region22: #{tpu_custom_call.1} parent=1 // pred_check
      _
    $region23: #{tpu_custom_call.1} parent=1 // pred_check_branch
      %77 = sbr.rel (0) target = $region25
    $region24: #{tpu_custom_call.1} parent=1 // pred_region
      %s79 = ssub.s32 1024, 1024
      %80 = vsyncadd [#allocation12], %s79
      %s81 = sshll.u32 [#allocation11], 4
      %s82 = int_to_ptr.vmem [resolvable:$true] %s81
      %87 = dma.hbm_to_vmem [thread:$0]  %s5, 1024, %s82, [#allocation12], 64, 64, 4
    $region25: #{tpu_custom_call.1} parent=1 // pred_fallthru
      _
    // Predicated region
    $region26: #{tpu_custom_call.1} parent=1 // pred_check
      _
    $region27: #{tpu_custom_call.1} parent=1 // pred_check_branch
      %89 = sbr.rel (0) target = $region29
    $region28: #{tpu_custom_call.1} parent=1 // pred_region
      %s91 = ssub.s32 1024, 1024
      %92 = vsyncadd [#allocation12], %s91
      %s93 = sshll.u32 [#allocation13], 4
      %s94 = int_to_ptr.vmem [resolvable:$true] %s93
      %99 = dma.hbm_to_vmem [thread:$0]  %s6, 1024, %s94, [#allocation12], 64, 64, 4
    $region29: #{tpu_custom_call.1} parent=1 // pred_fallthru
      _
    // Predicated region
    $region30: #{tpu_custom_call.1} parent=1 // pred_check
      _
    $region31: #{tpu_custom_call.1} parent=1 // pred_check_branch
      %101 = sbr.rel (0) target = $region33
    $region32: #{tpu_custom_call.1} parent=1 // pred_region
      _
    $region33: #{tpu_custom_call.1} parent=1 // pred_fallthru
      _
    // Predicated region
    $region34: #{tpu_custom_call.1} parent=1 // pred_check
      _
    $region35: #{tpu_custom_call.1} parent=1 // pred_check_branch
      %103 = sbr.rel (0) target = $region37
    $region36: #{tpu_custom_call.1} parent=1 // pred_region
      %104 = dma.done [#allocation3], 128
    $region37: #{tpu_custom_call.1} parent=1 // pred_fallthru
      _
    // Predicated region
    $region38: #{tpu_custom_call.1} parent=1 // pred_check
      _
    $region39: #{tpu_custom_call.1} parent=1 // pred_check_branch
      %106 = sbr.rel (0) target = $region41
    $region40: #{tpu_custom_call.1} parent=1 // pred_region
      %107 = dma.done [#allocation6], 512
    $region41: #{tpu_custom_call.1} parent=1 // pred_fallthru
      _
    // Predicated region
    $region42: #{tpu_custom_call.1} parent=1 // pred_check
      _
    $region43: #{tpu_custom_call.1} parent=1 // pred_check_branch
      %109 = sbr.rel (0) target = $region45
    $region44: #{tpu_custom_call.1} parent=1 // pred_region
      %110 = dma.done [#allocation6], 1024
    $region45: #{tpu_custom_call.1} parent=1 // pred_fallthru
      _
    // Predicated region
    $region46: #{tpu_custom_call.1} parent=1 // pred_check
      _
    $region47: #{tpu_custom_call.1} parent=1 // pred_check_branch
      %112 = sbr.rel (0) target = $region49
    $region48: #{tpu_custom_call.1} parent=1 // pred_region
      %113 = dma.done [#allocation9], 1024
    $region49: #{tpu_custom_call.1} parent=1 // pred_fallthru
      _
    // Predicated region
    $region50: #{tpu_custom_call.1} parent=1 // pred_check
      _
    $region51: #{tpu_custom_call.1} parent=1 // pred_check_branch
      %115 = sbr.rel (0) target = $region53
    $region52: #{tpu_custom_call.1} parent=1 // pred_region
      %116 = dma.done [#allocation9], 1024
    $region53: #{tpu_custom_call.1} parent=1 // pred_fallthru
      _
    // Predicated region
    $region54: #{tpu_custom_call.1} parent=1 // pred_check
      _
    $region55: #{tpu_custom_call.1} parent=1 // pred_check_branch
      %118 = sbr.rel (0) target = $region57
    $region56: #{tpu_custom_call.1} parent=1 // pred_region
      %119 = dma.done [#allocation12], 1024
    $region57: #{tpu_custom_call.1} parent=1 // pred_fallthru
      _
    // Predicated region
    $region58: #{tpu_custom_call.1} parent=1 // pred_check
      _
    $region59: #{tpu_custom_call.1} parent=1 // pred_check_branch
      %121 = sbr.rel (0) target = $region61
    $region60: #{tpu_custom_call.1} parent=1 // pred_region
      %122 = dma.done [#allocation12], 1024
    $region61: #{tpu_custom_call.1} parent=1 // pred_fallthru
      _
    %v124 = vld [vmem:[#allocation2] sm:$0xff]
    %v125 = vpack.c.bf16 %v124, %v124
    %v126 = vld [vmem:[#allocation5] sm:$0xf]
    %v127 = vld [vmem:[#allocation5 + $0x4] sm:$0xf]
    %v128 = vld [vmem:[#allocation5 + $0x8] sm:$0xf]
    %v129 = vld [vmem:[#allocation5 + $0xc] sm:$0xf]
    %v130 = vld [vmem:[#allocation5 + $0x10] sm:$0xf]
    %v131 = vld [vmem:[#allocation5 + $0x14] sm:$0xf]
    %v132 = vld [vmem:[#allocation5 + $0x18] sm:$0xf]
    %v133 = vld [vmem:[#allocation5 + $0x1c] sm:$0xf]
    %v134 = vld [vmem:[%s7] sm:$0x1]
    %v136 = vlaneseq
    %v137 = vshrl.u32 %v136, 7
    %v138 = vsub.s32 0, %v137
    %v139 = vrot.slane %v134, %v138
    %v149 = vunpack.c.l.b16 %v126
    %v150 = vunpack.c.l.b16 %v127
    %v151 = vunpack.c.l.b16 %v128
    %v152 = vunpack.c.l.b16 %v129
    %v153 = vunpack.c.l.b16 %v130
    %v154 = vunpack.c.l.b16 %v131
    %v155 = vunpack.c.l.b16 %v132
    %v156 = vunpack.c.l.b16 %v133
    %v157 = vpack.c.b16 %v150, %v149
    %v158 = vpack.c.b16 %v152, %v151
    %v159 = vpack.c.b16 %v154, %v153
    %v160 = vpack.c.b16 %v156, %v155
    %vm165 = vcmask 523264
    %v167 = vsel %vm165, %v125, 0
    %169 = vmatprep.subr.bf16.mxu0 0
    %170 = vmatpush1.bf16.msra.mxu0 0
    %171 = vmatprep.subr.bf16.mxu0 0
    %172 = vmatpush1.bf16.msra.mxu0 0
    %173 = vmatprep.subr.bf16.mxu0 0
    %174 = vmatpush1.bf16.msra.mxu0 0
    %175 = vmatprep.subr.bf16.mxu0 0
    %176 = vmatpush1.bf16.msra.mxu0 0
    %177 = vmatprep.subr.bf16.mxu0 0
    %178 = vmatpush1.bf16.msra.mxu0 %v160
    %179 = vmatprep.subr.bf16.mxu0 0
    %180 = vmatpush1.bf16.msra.mxu0 %v159
    %181 = vmatprep.subr.bf16.mxu0 0
    %182 = vmatpush1.bf16.msra.mxu0 %v158
    %183 = vmatprep.subr.bf16.mxu0 0
    %184 = vmatpush1.bf16.msra.mxu0 %v157
    %185 = vmatprep.subr.bf16.mxu0 0
    %186 = vmatpush2.bf16.msra.mxu0 0
    %187 = vmatprep.subr.bf16.mxu0 0
    %188 = vmatpush2.bf16.msra.mxu0 0
    %189 = vmatprep.subr.bf16.mxu0 0
    %190 = vmatpush2.bf16.msra.mxu0 0
    %191 = vmatprep.subr.bf16.mxu0 0
    %192 = vmatpush2.bf16.msra.mxu0 0
    %193 = vmatprep.subr.bf16.mxu0 0
    %194 = vmatpush2.bf16.msra.mxu0 0
    %195 = vmatprep.subr.bf16.mxu0 0
    %196 = vmatpush2.bf16.msra.mxu0 0
    %197 = vmatprep.subr.bf16.mxu0 0
    %198 = vmatpush2.bf16.msra.mxu0 0
    %199 = vmatprep.subr.bf16.mxu0 0
    %200 = vmatpush2.bf16.msra.mxu0 0
    %201 = vmatprep.mubr.bf16.mxu0 0
    %202 = vmatmul.mubr.bf16.gmra.mxu0 %v167
    %v203 = vpop.f32.mrf.mxu0
    %v204 = vadd.f32 %v139, %v203
    %v205 = vpop.f32.mrf.mxu0
    %v206 = vpop.f32.mrf.mxu0
    %v207 = vpop.f32.mrf.mxu0
    %208 = vdwg.mxu0
    %v209 = vmax.f32 %v204, 0.0
    %v210 = vpack.c.bf16 %v209, %v209
    %v211 = vld [vmem:[#allocation7] sm:$0xf]
    %v212 = vld [vmem:[#allocation7 + $0x4] sm:$0xf]
    %v213 = vld [vmem:[#allocation7 + $0x8] sm:$0xf]
    %v214 = vld [vmem:[#allocation7 + $0xc] sm:$0xf]
    %v215 = vld [vmem:[#allocation7 + $0x10] sm:$0xf]
    %v216 = vld [vmem:[#allocation7 + $0x14] sm:$0xf]
    %v217 = vld [vmem:[#allocation7 + $0x18] sm:$0xf]
    %v218 = vld [vmem:[#allocation7 + $0x1c] sm:$0xf]
    %v219 = vld [vmem:[#allocation7 + $0x20] sm:$0xf]
    %v220 = vld [vmem:[#allocation7 + $0x24] sm:$0xf]
    %v221 = vld [vmem:[#allocation7 + $0x28] sm:$0xf]
    %v222 = vld [vmem:[#allocation7 + $0x2c] sm:$0xf]
    %v223 = vld [vmem:[#allocation7 + $0x30] sm:$0xf]
    %v224 = vld [vmem:[#allocation7 + $0x34] sm:$0xf]
    %v225 = vld [vmem:[#allocation7 + $0x38] sm:$0xf]
    %v226 = vld [vmem:[#allocation7 + $0x3c] sm:$0xf]
    %v227 = vld [vmem:[%s7 + $0x1] sm:$0x1]
    %v229 = vlaneseq
    %v230 = vshrl.u32 %v229, 7
    %v231 = vsub.s32 0, %v230
    %v232 = vrot.slane %v227, %v231
    %v250 = vunpack.c.l.b16 %v211
    %v251 = vunpack.c.l.b16 %v212
    %v252 = vunpack.c.l.b16 %v213
    %v253 = vunpack.c.l.b16 %v214
    %v254 = vunpack.c.l.b16 %v215
    %v255 = vunpack.c.l.b16 %v216
    %v256 = vunpack.c.l.b16 %v217
    %v257 = vunpack.c.l.b16 %v218
    %v258 = vunpack.c.l.b16 %v219
    %v259 = vunpack.c.l.b16 %v220
    %v260 = vunpack.c.l.b16 %v221
    %v261 = vunpack.c.l.b16 %v222
    %v262 = vunpack.c.l.b16 %v223
    %v263 = vunpack.c.l.b16 %v224
    %v264 = vunpack.c.l.b16 %v225
    %v265 = vunpack.c.l.b16 %v226
    %v266 = vpack.c.b16 %v251, %v250
    %v267 = vpack.c.b16 %v253, %v252
    %v268 = vpack.c.b16 %v255, %v254
    %v269 = vpack.c.b16 %v257, %v256
    %v270 = vpack.c.b16 %v259, %v258
    %v271 = vpack.c.b16 %v261, %v260
    %v272 = vpack.c.b16 %v263, %v262
    %v273 = vpack.c.b16 %v265, %v264
    %282 = vmatprep.subr.bf16.mxu0 0
    %283 = vmatpush1.bf16.msra.mxu0 %v273
    %284 = vmatprep.subr.bf16.mxu0 0
    %285 = vmatpush1.bf16.msra.mxu0 %v272
    %286 = vmatprep.subr.bf16.mxu0 0
    %287 = vmatpush1.bf16.msra.mxu0 %v271
    %288 = vmatprep.subr.bf16.mxu0 0
    %289 = vmatpush1.bf16.msra.mxu0 %v270
    %290 = vmatprep.subr.bf16.mxu0 0
    %291 = vmatpush1.bf16.msra.mxu0 %v269
    %292 = vmatprep.subr.bf16.mxu0 0
    %293 = vmatpush1.bf16.msra.mxu0 %v268
    %294 = vmatprep.subr.bf16.mxu0 0
    %295 = vmatpush1.bf16.msra.mxu0 %v267
    %296 = vmatprep.subr.bf16.mxu0 0
    %297 = vmatpush1.bf16.msra.mxu0 %v266
    %298 = vmatprep.subr.bf16.mxu0 0
    %299 = vmatpush2.bf16.msra.mxu0 0
    %300 = vmatprep.subr.bf16.mxu0 0
    %301 = vmatpush2.bf16.msra.mxu0 0
    %302 = vmatprep.subr.bf16.mxu0 0
    %303 = vmatpush2.bf16.msra.mxu0 0
    %304 = vmatprep.subr.bf16.mxu0 0
    %305 = vmatpush2.bf16.msra.mxu0 0
    %306 = vmatprep.subr.bf16.mxu0 0
    %307 = vmatpush2.bf16.msra.mxu0 0
    %308 = vmatprep.subr.bf16.mxu0 0
    %309 = vmatpush2.bf16.msra.mxu0 0
    %310 = vmatprep.subr.bf16.mxu0 0
    %311 = vmatpush2.bf16.msra.mxu0 0
    %312 = vmatprep.subr.bf16.mxu0 0
    %313 = vmatpush2.bf16.msra.mxu0 0
    %314 = vmatprep.mubr.bf16.mxu0 0
    %315 = vmatmul.mubr.bf16.gmra.mxu0 %v210
    %v316 = vpop.f32.mrf.mxu0
    %v317 = vadd.f32 %v232, %v316
    %v318 = vpop.f32.mrf.mxu0
    %v319 = vpop.f32.mrf.mxu0
    %v320 = vpop.f32.mrf.mxu0
    %321 = vdwg.mxu0
    %v322 = vmax.f32 %v317, 0.0
    %v323 = vpack.c.bf16 %v322, %v322
    %v324 = vld [vmem:[#allocation8] sm:$0xf]
    %v325 = vld [vmem:[#allocation8 + $0x4] sm:$0xf]
    %v326 = vld [vmem:[#allocation8 + $0x8] sm:$0xf]
    %v327 = vld [vmem:[#allocation8 + $0xc] sm:$0xf]
    %v328 = vld [vmem:[#allocation8 + $0x10] sm:$0xf]
    %v329 = vld [vmem:[#allocation8 + $0x14] sm:$0xf]
    %v330 = vld [vmem:[#allocation8 + $0x18] sm:$0xf]
    %v331 = vld [vmem:[#allocation8 + $0x1c] sm:$0xf]
    %v332 = vld [vmem:[#allocation8 + $0x20] sm:$0xf]
    %v333 = vld [vmem:[#allocation8 + $0x24] sm:$0xf]
    %v334 = vld [vmem:[#allocation8 + $0x28] sm:$0xf]
    %v335 = vld [vmem:[#allocation8 + $0x2c] sm:$0xf]
    %v336 = vld [vmem:[#allocation8 + $0x30] sm:$0xf]
    %v337 = vld [vmem:[#allocation8 + $0x34] sm:$0xf]
    %v338 = vld [vmem:[#allocation8 + $0x38] sm:$0xf]
    %v339 = vld [vmem:[#allocation8 + $0x3c] sm:$0xf]
    %v340 = vld [vmem:[%s7 + $0x2] sm:$0x1]
    %v342 = vlaneseq
    %v343 = vshrl.u32 %v342, 7
    %v344 = vsub.s32 0, %v343
    %v345 = vrot.slane %v340, %v344
    %v363 = vunpack.c.l.b16 %v324
    %v364 = vunpack.c.l.b16 %v325
    %v365 = vunpack.c.l.b16 %v326
    %v366 = vunpack.c.l.b16 %v327
    %v367 = vunpack.c.l.b16 %v328
    %v368 = vunpack.c.l.b16 %v329
    %v369 = vunpack.c.l.b16 %v330
    %v370 = vunpack.c.l.b16 %v331
    %v371 = vunpack.c.l.b16 %v332
    %v372 = vunpack.c.l.b16 %v333
    %v373 = vunpack.c.l.b16 %v334
    %v374 = vunpack.c.l.b16 %v335
    %v375 = vunpack.c.l.b16 %v336
    %v376 = vunpack.c.l.b16 %v337
    %v377 = vunpack.c.l.b16 %v338
    %v378 = vunpack.c.l.b16 %v339
    %v379 = vpack.c.b16 %v364, %v363
    %v380 = vpack.c.b16 %v366, %v365
    %v381 = vpack.c.b16 %v368, %v367
    %v382 = vpack.c.b16 %v370, %v369
    %v383 = vpack.c.b16 %v372, %v371
    %v384 = vpack.c.b16 %v374, %v373
    %v385 = vpack.c.b16 %v376, %v375
    %v386 = vpack.c.b16 %v378, %v377
    %395 = vmatprep.subr.bf16.mxu0 0
    %396 = vmatpush1.bf16.msra.mxu0 %v386
    %397 = vmatprep.subr.bf16.mxu0 0
    %398 = vmatpush1.bf16.msra.mxu0 %v385
    %399 = vmatprep.subr.bf16.mxu0 0
    %400 = vmatpush1.bf16.msra.mxu0 %v384
    %401 = vmatprep.subr.bf16.mxu0 0
    %402 = vmatpush1.bf16.msra.mxu0 %v383
    %403 = vmatprep.subr.bf16.mxu0 0
    %404 = vmatpush1.bf16.msra.mxu0 %v382
    %405 = vmatprep.subr.bf16.mxu0 0
    %406 = vmatpush1.bf16.msra.mxu0 %v381
    %407 = vmatprep.subr.bf16.mxu0 0
    %408 = vmatpush1.bf16.msra.mxu0 %v380
    %409 = vmatprep.subr.bf16.mxu0 0
    %410 = vmatpush1.bf16.msra.mxu0 %v379
    %411 = vmatprep.subr.bf16.mxu0 0
    %412 = vmatpush2.bf16.msra.mxu0 0
    %413 = vmatprep.subr.bf16.mxu0 0
    %414 = vmatpush2.bf16.msra.mxu0 0
    %415 = vmatprep.subr.bf16.mxu0 0
    %416 = vmatpush2.bf16.msra.mxu0 0
    %417 = vmatprep.subr.bf16.mxu0 0
    %418 = vmatpush2.bf16.msra.mxu0 0
    %419 = vmatprep.subr.bf16.mxu0 0
    %420 = vmatpush2.bf16.msra.mxu0 0
    %421 = vmatprep.subr.bf16.mxu0 0
    %422 = vmatpush2.bf16.msra.mxu0 0
    %423 = vmatprep.subr.bf16.mxu0 0
    %424 = vmatpush2.bf16.msra.mxu0 0
    %425 = vmatprep.subr.bf16.mxu0 0
    %426 = vmatpush2.bf16.msra.mxu0 0
    %427 = vmatprep.mubr.bf16.mxu0 0
    %428 = vmatmul.mubr.bf16.gmra.mxu0 %v323
    %v429 = vpop.f32.mrf.mxu0
    %v430 = vadd.f32 %v345, %v429
    %v431 = vpop.f32.mrf.mxu0
    %v432 = vpop.f32.mrf.mxu0
    %v433 = vpop.f32.mrf.mxu0
    %434 = vdwg.mxu0
    %v435 = vmax.f32 %v430, 0.0
    %v436 = vpack.c.bf16 %v435, %v435
    %v437 = vld [vmem:[#allocation10] sm:$0xf]
    %v438 = vld [vmem:[#allocation10 + $0x4] sm:$0xf]
    %v439 = vld [vmem:[#allocation10 + $0x8] sm:$0xf]
    %v440 = vld [vmem:[#allocation10 + $0xc] sm:$0xf]
    %v441 = vld [vmem:[#allocation10 + $0x10] sm:$0xf]
    %v442 = vld [vmem:[#allocation10 + $0x14] sm:$0xf]
    %v443 = vld [vmem:[#allocation10 + $0x18] sm:$0xf]
    %v444 = vld [vmem:[#allocation10 + $0x1c] sm:$0xf]
    %v445 = vld [vmem:[#allocation10 + $0x20] sm:$0xf]
    %v446 = vld [vmem:[#allocation10 + $0x24] sm:$0xf]
    %v447 = vld [vmem:[#allocation10 + $0x28] sm:$0xf]
    %v448 = vld [vmem:[#allocation10 + $0x2c] sm:$0xf]
    %v449 = vld [vmem:[#allocation10 + $0x30] sm:$0xf]
    %v450 = vld [vmem:[#allocation10 + $0x34] sm:$0xf]
    %v451 = vld [vmem:[#allocation10 + $0x38] sm:$0xf]
    %v452 = vld [vmem:[#allocation10 + $0x3c] sm:$0xf]
    %v453 = vld [vmem:[%s7 + $0x3] sm:$0x1]
    %v455 = vlaneseq
    %v456 = vshrl.u32 %v455, 7
    %v457 = vsub.s32 0, %v456
    %v458 = vrot.slane %v453, %v457
    %v476 = vunpack.c.l.b16 %v437
    %v477 = vunpack.c.l.b16 %v438
    %v478 = vunpack.c.l.b16 %v439
    %v479 = vunpack.c.l.b16 %v440
    %v480 = vunpack.c.l.b16 %v441
    %v481 = vunpack.c.l.b16 %v442
    %v482 = vunpack.c.l.b16 %v443
    %v483 = vunpack.c.l.b16 %v444
    %v484 = vunpack.c.l.b16 %v445
    %v485 = vunpack.c.l.b16 %v446
    %v486 = vunpack.c.l.b16 %v447
    %v487 = vunpack.c.l.b16 %v448
    %v488 = vunpack.c.l.b16 %v449
    %v489 = vunpack.c.l.b16 %v450
    %v490 = vunpack.c.l.b16 %v451
    %v491 = vunpack.c.l.b16 %v452
    %v492 = vpack.c.b16 %v477, %v476
    %v493 = vpack.c.b16 %v479, %v478
    %v494 = vpack.c.b16 %v481, %v480
    %v495 = vpack.c.b16 %v483, %v482
    %v496 = vpack.c.b16 %v485, %v484
    %v497 = vpack.c.b16 %v487, %v486
    %v498 = vpack.c.b16 %v489, %v488
    %v499 = vpack.c.b16 %v491, %v490
    %508 = vmatprep.subr.bf16.mxu0 0
    %509 = vmatpush1.bf16.msra.mxu0 %v499
    %510 = vmatprep.subr.bf16.mxu0 0
    %511 = vmatpush1.bf16.msra.mxu0 %v498
    %512 = vmatprep.subr.bf16.mxu0 0
    %513 = vmatpush1.bf16.msra.mxu0 %v497
    %514 = vmatprep.subr.bf16.mxu0 0
    %515 = vmatpush1.bf16.msra.mxu0 %v496
    %516 = vmatprep.subr.bf16.mxu0 0
    %517 = vmatpush1.bf16.msra.mxu0 %v495
    %518 = vmatprep.subr.bf16.mxu0 0
    %519 = vmatpush1.bf16.msra.mxu0 %v494
    %520 = vmatprep.subr.bf16.mxu0 0
    %521 = vmatpush1.bf16.msra.mxu0 %v493
    %522 = vmatprep.subr.bf16.mxu0 0
    %523 = vmatpush1.bf16.msra.mxu0 %v492
    %524 = vmatprep.subr.bf16.mxu0 0
    %525 = vmatpush2.bf16.msra.mxu0 0
    %526 = vmatprep.subr.bf16.mxu0 0
    %527 = vmatpush2.bf16.msra.mxu0 0
    %528 = vmatprep.subr.bf16.mxu0 0
    %529 = vmatpush2.bf16.msra.mxu0 0
    %530 = vmatprep.subr.bf16.mxu0 0
    %531 = vmatpush2.bf16.msra.mxu0 0
    %532 = vmatprep.subr.bf16.mxu0 0
    %533 = vmatpush2.bf16.msra.mxu0 0
    %534 = vmatprep.subr.bf16.mxu0 0
    %535 = vmatpush2.bf16.msra.mxu0 0
    %536 = vmatprep.subr.bf16.mxu0 0
    %537 = vmatpush2.bf16.msra.mxu0 0
    %538 = vmatprep.subr.bf16.mxu0 0
    %539 = vmatpush2.bf16.msra.mxu0 0
    %540 = vmatprep.mubr.bf16.mxu0 0
    %541 = vmatmul.mubr.bf16.gmra.mxu0 %v436
    %v542 = vpop.f32.mrf.mxu0
    %v543 = vadd.f32 %v458, %v542
    %v544 = vpop.f32.mrf.mxu0
    %v545 = vpop.f32.mrf.mxu0
    %v546 = vpop.f32.mrf.mxu0
    %547 = vdwg.mxu0
    %v548 = vmax.f32 %v543, 0.0
    %v549 = vpack.c.bf16 %v548, %v548
    %v550 = vld [vmem:[#allocation11] sm:$0xf]
    %v551 = vld [vmem:[#allocation11 + $0x4] sm:$0xf]
    %v552 = vld [vmem:[#allocation11 + $0x8] sm:$0xf]
    %v553 = vld [vmem:[#allocation11 + $0xc] sm:$0xf]
    %v554 = vld [vmem:[#allocation11 + $0x10] sm:$0xf]
    %v555 = vld [vmem:[#allocation11 + $0x14] sm:$0xf]
    %v556 = vld [vmem:[#allocation11 + $0x18] sm:$0xf]
    %v557 = vld [vmem:[#allocation11 + $0x1c] sm:$0xf]
    %v558 = vld [vmem:[#allocation11 + $0x20] sm:$0xf]
    %v559 = vld [vmem:[#allocation11 + $0x24] sm:$0xf]
    %v560 = vld [vmem:[#allocation11 + $0x28] sm:$0xf]
    %v561 = vld [vmem:[#allocation11 + $0x2c] sm:$0xf]
    %v562 = vld [vmem:[#allocation11 + $0x30] sm:$0xf]
    %v563 = vld [vmem:[#allocation11 + $0x34] sm:$0xf]
    %v564 = vld [vmem:[#allocation11 + $0x38] sm:$0xf]
    %v565 = vld [vmem:[#allocation11 + $0x3c] sm:$0xf]
    %v566 = vld [vmem:[%s7 + $0x4] sm:$0x1]
    %v568 = vlaneseq
    %v569 = vshrl.u32 %v568, 7
    %v570 = vsub.s32 0, %v569
    %v571 = vrot.slane %v566, %v570
    %v589 = vunpack.c.l.b16 %v550
    %v590 = vunpack.c.l.b16 %v551
    %v591 = vunpack.c.l.b16 %v552
    %v592 = vunpack.c.l.b16 %v553
    %v593 = vunpack.c.l.b16 %v554
    %v594 = vunpack.c.l.b16 %v555
    %v595 = vunpack.c.l.b16 %v556
    %v596 = vunpack.c.l.b16 %v557
    %v597 = vunpack.c.l.b16 %v558
    %v598 = vunpack.c.l.b16 %v559
    %v599 = vunpack.c.l.b16 %v560
    %v600 = vunpack.c.l.b16 %v561
    %v601 = vunpack.c.l.b16 %v562
    %v602 = vunpack.c.l.b16 %v563
    %v603 = vunpack.c.l.b16 %v564
    %v604 = vunpack.c.l.b16 %v565
    %v605 = vpack.c.b16 %v590, %v589
    %v606 = vpack.c.b16 %v592, %v591
    %v607 = vpack.c.b16 %v594, %v593
    %v608 = vpack.c.b16 %v596, %v595
    %v609 = vpack.c.b16 %v598, %v597
    %v610 = vpack.c.b16 %v600, %v599
    %v611 = vpack.c.b16 %v602, %v601
    %v612 = vpack.c.b16 %v604, %v603
    %621 = vmatprep.subr.bf16.mxu0 0
    %622 = vmatpush1.bf16.msra.mxu0 %v612
    %623 = vmatprep.subr.bf16.mxu0 0
    %624 = vmatpush1.bf16.msra.mxu0 %v611
    %625 = vmatprep.subr.bf16.mxu0 0
    %626 = vmatpush1.bf16.msra.mxu0 %v610
    %627 = vmatprep.subr.bf16.mxu0 0
    %628 = vmatpush1.bf16.msra.mxu0 %v609
    %629 = vmatprep.subr.bf16.mxu0 0
    %630 = vmatpush1.bf16.msra.mxu0 %v608
    %631 = vmatprep.subr.bf16.mxu0 0
    %632 = vmatpush1.bf16.msra.mxu0 %v607
    %633 = vmatprep.subr.bf16.mxu0 0
    %634 = vmatpush1.bf16.msra.mxu0 %v606
    %635 = vmatprep.subr.bf16.mxu0 0
    %636 = vmatpush1.bf16.msra.mxu0 %v605
    %637 = vmatprep.subr.bf16.mxu0 0
    %638 = vmatpush2.bf16.msra.mxu0 0
    %639 = vmatprep.subr.bf16.mxu0 0
    %640 = vmatpush2.bf16.msra.mxu0 0
    %641 = vmatprep.subr.bf16.mxu0 0
    %642 = vmatpush2.bf16.msra.mxu0 0
    %643 = vmatprep.subr.bf16.mxu0 0
    %644 = vmatpush2.bf16.msra.mxu0 0
    %645 = vmatprep.subr.bf16.mxu0 0
    %646 = vmatpush2.bf16.msra.mxu0 0
    %647 = vmatprep.subr.bf16.mxu0 0
    %648 = vmatpush2.bf16.msra.mxu0 0
    %649 = vmatprep.subr.bf16.mxu0 0
    %650 = vmatpush2.bf16.msra.mxu0 0
    %651 = vmatprep.subr.bf16.mxu0 0
    %652 = vmatpush2.bf16.msra.mxu0 0
    %653 = vmatprep.mubr.bf16.mxu0 0
    %654 = vmatmul.mubr.bf16.gmra.mxu0 %v549
    %v655 = vpop.f32.mrf.mxu0
    %v656 = vadd.f32 %v571, %v655
    %v657 = vpop.f32.mrf.mxu0
    %v658 = vpop.f32.mrf.mxu0
    %v659 = vpop.f32.mrf.mxu0
    %660 = vdwg.mxu0
    %v661 = vmax.f32 %v656, 0.0
    %v662 = vpack.c.bf16 %v661, %v661
    %v663 = vld [vmem:[#allocation13] sm:$0xf]
    %v664 = vld [vmem:[#allocation13 + $0x4] sm:$0xf]
    %v665 = vld [vmem:[#allocation13 + $0x8] sm:$0xf]
    %v666 = vld [vmem:[#allocation13 + $0xc] sm:$0xf]
    %v667 = vld [vmem:[#allocation13 + $0x10] sm:$0xf]
    %v668 = vld [vmem:[#allocation13 + $0x14] sm:$0xf]
    %v669 = vld [vmem:[#allocation13 + $0x18] sm:$0xf]
    %v670 = vld [vmem:[#allocation13 + $0x1c] sm:$0xf]
    %v671 = vld [vmem:[#allocation13 + $0x20] sm:$0xf]
    %v672 = vld [vmem:[#allocation13 + $0x24] sm:$0xf]
    %v673 = vld [vmem:[#allocation13 + $0x28] sm:$0xf]
    %v674 = vld [vmem:[#allocation13 + $0x2c] sm:$0xf]
    %v675 = vld [vmem:[#allocation13 + $0x30] sm:$0xf]
    %v676 = vld [vmem:[#allocation13 + $0x34] sm:$0xf]
    %v677 = vld [vmem:[#allocation13 + $0x38] sm:$0xf]
    %v678 = vld [vmem:[#allocation13 + $0x3c] sm:$0xf]
    %v679 = vld [vmem:[%s7 + $0x5] sm:$0x1]
    %v681 = vlaneseq
    %v682 = vshrl.u32 %v681, 7
    %v683 = vsub.s32 0, %v682
    %v684 = vrot.slane %v679, %v683
    %v702 = vunpack.c.l.b16 %v663
    %v703 = vunpack.c.l.b16 %v664
    %v704 = vunpack.c.l.b16 %v665
    %v705 = vunpack.c.l.b16 %v666
    %v706 = vunpack.c.l.b16 %v667
    %v707 = vunpack.c.l.b16 %v668
    %v708 = vunpack.c.l.b16 %v669
    %v709 = vunpack.c.l.b16 %v670
    %v710 = vunpack.c.l.b16 %v671
    %v711 = vunpack.c.l.b16 %v672
    %v712 = vunpack.c.l.b16 %v673
    %v713 = vunpack.c.l.b16 %v674
    %v714 = vunpack.c.l.b16 %v675
    %v715 = vunpack.c.l.b16 %v676
    %v716 = vunpack.c.l.b16 %v677
    %v717 = vunpack.c.l.b16 %v678
    %v718 = vpack.c.b16 %v703, %v702
    %v719 = vpack.c.b16 %v705, %v704
    %v720 = vpack.c.b16 %v707, %v706
    %v721 = vpack.c.b16 %v709, %v708
    %v722 = vpack.c.b16 %v711, %v710
    %v723 = vpack.c.b16 %v713, %v712
    %v724 = vpack.c.b16 %v715, %v714
    %v725 = vpack.c.b16 %v717, %v716
    %734 = vmatprep.subr.bf16.mxu0 0
    %735 = vmatpush1.bf16.msra.mxu0 %v725
    %736 = vmatprep.subr.bf16.mxu0 0
    %737 = vmatpush1.bf16.msra.mxu0 %v724
    %738 = vmatprep.subr.bf16.mxu0 0
    %739 = vmatpush1.bf16.msra.mxu0 %v723
    %740 = vmatprep.subr.bf16.mxu0 0
    %741 = vmatpush1.bf16.msra.mxu0 %v722
    %742 = vmatprep.subr.bf16.mxu0 0
    %743 = vmatpush1.bf16.msra.mxu0 %v721
    %744 = vmatprep.subr.bf16.mxu0 0
    %745 = vmatpush1.bf16.msra.mxu0 %v720
    %746 = vmatprep.subr.bf16.mxu0 0
    %747 = vmatpush1.bf16.msra.mxu0 %v719
    %748 = vmatprep.subr.bf16.mxu0 0
    %749 = vmatpush1.bf16.msra.mxu0 %v718
    %750 = vmatprep.subr.bf16.mxu0 0
    %751 = vmatpush2.bf16.msra.mxu0 0
    %752 = vmatprep.subr.bf16.mxu0 0
    %753 = vmatpush2.bf16.msra.mxu0 0
    %754 = vmatprep.subr.bf16.mxu0 0
    %755 = vmatpush2.bf16.msra.mxu0 0
    %756 = vmatprep.subr.bf16.mxu0 0
    %757 = vmatpush2.bf16.msra.mxu0 0
    %758 = vmatprep.subr.bf16.mxu0 0
    %759 = vmatpush2.bf16.msra.mxu0 0
    %760 = vmatprep.subr.bf16.mxu0 0
    %761 = vmatpush2.bf16.msra.mxu0 0
    %762 = vmatprep.subr.bf16.mxu0 0
    %763 = vmatpush2.bf16.msra.mxu0 0
    %764 = vmatprep.subr.bf16.mxu0 0
    %765 = vmatpush2.bf16.msra.mxu0 0
    %766 = vmatprep.mubr.bf16.mxu0 0
    %767 = vmatmul.mubr.bf16.gmra.mxu0 %v662
    %v768 = vpop.f32.mrf.mxu0
    %v769 = vadd.f32 %v684, %v768
    %v770 = vpop.f32.mrf.mxu0
    %v771 = vpop.f32.mrf.mxu0
    %v772 = vpop.f32.mrf.mxu0
    %773 = vdwg.mxu0
    %v774 = vpack.c.bf16 %v769, %v769
    %775 = vst [vmem:[#allocation14] sm:$0xf] %v774
    // Predicated region
    $region62: #{tpu_custom_call.1} parent=1 // pred_check
      _
    $region63: #{tpu_custom_call.1} parent=1 // pred_check_branch
      %777 = sbr.rel (0) target = $region65
    $region64: #{tpu_custom_call.1} parent=1 // pred_region
      %s779 = ssub.s32 64, 64
      %780 = vsyncadd [#allocation4], %s779
      %s782 = sshll.u32 [#allocation14], 4
      %s783 = int_to_ptr.vmem [resolvable:$true] %s782
      %785 = dma.vmem_to_hbm [thread:$0]  %s783, 64, %s8, [#allocation4]
    $region65: #{tpu_custom_call.1} parent=1 // pred_fallthru
      _
    // Predicated region
    $region66: #{tpu_custom_call.1} parent=1 // pred_check
      _
    $region67: #{tpu_custom_call.1} parent=1 // pred_check_branch
      %787 = sbr.rel (0) target = $region69
    $region68: #{tpu_custom_call.1} parent=1 // pred_region
      %788 = dma.done [#allocation4], 64
    $region69: #{tpu_custom_call.1} parent=1 // pred_fallthru
      _
    %789 = vsyncpa [#allocation3], 1
    %790 = vsyncpa [#allocation6], 1
    %791 = vsyncpa [#allocation9], 1
    %792 = vsyncpa [#allocation12], 1
    %793 = vsyncpa [#allocation4], 1

</llo_original>
